<compile_context>
chip_gen: v5e
topology: v5e:2x2
jax: 0.10.0
libtpu: 0.0.40
codegen_flags: <defaults>
</compile_context>

<pallas_src>
import numpy as np
import jax
import jax.numpy as jnp
from jax.experimental import pallas as pl
from jax.experimental.pallas import tpu as pltpu

REG_OUT = 10  # final Linear output width


def _r8(x):
    return ((x + 7) // 8) * 8


def _r128(x):
    return ((x + 127) // 128) * 128


def pack_params(params, *, input_dim, input_size, hidden_size, num_layers):
    """Host-side, one-time packing.

    Wave lane layout (width GW = round_up(4*L*H, 128)), gate-grouped:
      [ R (L*H) | Z (L*H) | N_in (L*H) | N_h (L*H) | pad ]
    within each group, layer l occupies lanes [l*H, (l+1)*H).
    """
    n = input_size
    d = input_dim // input_size
    H = hidden_size
    L = num_layers
    LH = L * H
    GW = _r128(4 * LH)
    d8 = _r8(d)

    # row offsets inside `wg` (pre-loop weights + single fused bias row)
    r_emb_w, r_emb_b, r_ih0, r_bias = 0, d8, d8 + 8, d8 + 8 + d8
    rows = r_bias + 8

    wg = np.zeros((rows, GW), np.float32)
    bias = np.zeros((GW,), np.float32)

    # patch-embedding Linear(d, d)
    wg[r_emb_w:r_emb_w + d, 0:d] = np.asarray(params["w_emb"], np.float32).T
    wg[r_emb_b, 0:d] = np.asarray(params["b_emb"], np.float32)

    # layer-0 input gates, scattered straight into the wave lane groups
    w_ih0 = np.asarray(params["w_ih_l0"], np.float32)          # (3H, d)
    b_ih0 = np.asarray(params["b_ih_l0"], np.float32)
    wg[r_ih0:r_ih0 + d, 0 * LH:0 * LH + H] = w_ih0[0:H].T          # r (input part)
    wg[r_ih0:r_ih0 + d, 1 * LH:1 * LH + H] = w_ih0[H:2 * H].T      # z (input part)
    wg[r_ih0:r_ih0 + d, 2 * LH:2 * LH + H] = w_ih0[2 * H:3 * H].T  # n (input part)
    bias[0 * LH:0 * LH + H] += b_ih0[0:H]
    bias[1 * LH:1 * LH + H] += b_ih0[H:2 * H]
    bias[2 * LH:2 * LH + H] += b_ih0[2 * H:3 * H]

    # wavefront block weight: ONE (L*H, GW) matmul computes every layer's gates
    wv = np.zeros((LH, GW), np.float32)
    for l in range(L):
        w_hh = np.asarray(params[f"w_hh_l{l}"], np.float32)    # (3H, H)
        b_hh = np.asarray(params[f"b_hh_l{l}"], np.float32)
        rh = slice(l * H, (l + 1) * H)                          # h_l rows
        cl = l * H                                              # this layer's lane offset
        wv[rh, 0 * LH + cl:0 * LH + cl + H] = w_hh[0:H].T           # r (hidden part)
        wv[rh, 1 * LH + cl:1 * LH + cl + H] = w_hh[H:2 * H].T       # z (hidden part)
        wv[rh, 3 * LH + cl:3 * LH + cl + H] = w_hh[2 * H:3 * H].T   # n (hidden part)
        bias[0 * LH + cl:0 * LH + cl + H] += b_hh[0:H]              # pre-sum with b_ir
        bias[1 * LH + cl:1 * LH + cl + H] += b_hh[H:2 * H]          # pre-sum with b_iz
        bias[3 * LH + cl:3 * LH + cl + H] += b_hh[2 * H:3 * H]      # b_hn stays in r*(.)
        if l > 0:
            w_ih = np.asarray(params[f"w_ih_l{l}"], np.float32)  # (3H, H)
            b_ih = np.asarray(params[f"b_ih_l{l}"], np.float32)
            rx = slice((l - 1) * H, l * H)                        # h_{l-1} rows (layer input)
            wv[rx, 0 * LH + cl:0 * LH + cl + H] = w_ih[0:H].T
            wv[rx, 1 * LH + cl:1 * LH + cl + H] = w_ih[H:2 * H].T
            wv[rx, 2 * LH + cl:2 * LH + cl + H] = w_ih[2 * H:3 * H].T
            bias[0 * LH + cl:0 * LH + cl + H] += b_ih[0:H]
            bias[1 * LH + cl:1 * LH + cl + H] += b_ih[H:2 * H]
            bias[2 * LH + cl:2 * LH + cl + H] += b_ih[2 * H:3 * H]

    wg[r_bias, :] = bias

    # final Linear(n*H, 10); row t*H + j matches the (b, (s l)) flatten order
    reg = np.zeros((_r8(n * H + 1), REG_OUT), np.float32)
    reg[:n * H, :] = np.asarray(params["w_reg"], np.float32).T
    reg[n * H, :] = np.asarray(params["b_reg"], np.float32)

    return {"wg": jnp.asarray(wg), "wv": jnp.asarray(wv), "reg": jnp.asarray(reg)}


def make_gru_kernel(B, n, d, H, L):
    LH = L * H
    d8 = _r8(d)
    r_emb_w, r_emb_b, r_ih0, r_bias = 0, d8, d8 + 8, d8 + 8 + d8

    def kernel(x_ref, wg_ref, wv_ref, reg_ref, out_ref):
        # ------------ hoisted prologue (off the recurrent critical chain) ------------
        # patch embedding: per-patch Linear(d, d) as one batched matmul
        x = x_ref[...]                                           # (n*B, d), rows (t, b)
        emb_w = wg_ref[r_emb_w:r_emb_w + d, :][:, 0:d]           # (d, d)
        emb_b = wg_ref[r_emb_b:r_emb_b + 1, :][:, 0:d]           # (1, d)
        xe = jnp.dot(x, emb_w, preferred_element_type=jnp.float32) + emb_b

        # layer-0 input gates for ALL timesteps (+ the single fused bias row),
        # already scattered to the wave lane layout: one (n*B, d) @ (d, GW) matmul
        w_ih0 = wg_ref[r_ih0:r_ih0 + d, :]                       # (d, GW)
        bias = wg_ref[r_bias:r_bias + 1, :]                      # (1, GW)
        gi0 = jnp.dot(xe, w_ih0, preferred_element_type=jnp.float32) + bias
        # per-timestep slices prepared here so any realignment is off the chain
        gis = [gi0[t * B:(t + 1) * B, :] for t in range(n)]

        wave_w = wv_ref[...]                                     # (LH, GW), loaded once
        lane = jax.lax.broadcasted_iota(jnp.int32, (B, LH), 1)

        # ------------ stacked-GRU wavefront: ONE fused matmul per step ------------
        hcat = jnp.zeros((B, LH), jnp.float32)                   # [h_0 | h_1 | ... ]
        h_last = []
        for w in range(n + L - 1):
            # every layer's input + recurrent gates in a single block matmul
            wave = jnp.dot(hcat, wave_w, preferred_element_type=jnp.float32)
            full = wave + gis[min(w, n - 1)]     # hoisted layer-0 gates + all biases

            r = jax.nn.sigmoid(full[:, 0:LH])
            z = jax.nn.sigmoid(full[:, LH:2 * LH])
            ng = jnp.tanh(full[:, 2 * LH:3 * LH] + r * full[:, 3 * LH:4 * LH])
            h_new = (1.0 - z) * ng + z * hcat

            lo, hi = max(0, w - n + 1), min(w, L - 1)   # active layer range this step
            if lo == 0 and hi == L - 1:
                hcat = h_new
            else:                                        # ramp-up / ramp-down: freeze idle layers
                act = (lane >= lo * H) & (lane < (hi + 1) * H)
                hcat = jnp.where(act, h_new, hcat)

            if w >= L - 1:                               # last layer just produced timestep w-(L-1)
                h_last.append(hcat[:, (L - 1) * H:LH])

        # ------------ final Linear(n*H, 10): one matmul after the loop ------------
        feat = jnp.concatenate(h_last, axis=1)           # (B, n*H), timestep-major
        out_ref[...] = (jnp.dot(feat, reg_ref[0:n * H, :],
                                preferred_element_type=jnp.float32)
                        + reg_ref[n * H:n * H + 1, :])

    return kernel


def gru_forward_pallas(x_flat, packed, *, input_size, hidden_size, num_layers):
    """x_flat: (B, input_dim) float32.  packed = pack_params(...).  Returns (B, 10)."""
    B, input_dim = x_flat.shape
    n = input_size
    d = input_dim // n
    H = hidden_size

    # rows ordered (t, b): each timestep's hoisted gates are a contiguous row slice
    x_tb = x_flat.reshape(B, n, d).transpose(1, 0, 2).reshape(n * B, d)

    vmem = pl.BlockSpec(memory_space=pltpu.MemorySpace.VMEM)
    kernel = make_gru_kernel(B, n, d, H, num_layers)

    return pl.pallas_call(
        kernel,
        out_shape=jax.ShapeDtypeStruct((B, REG_OUT), jnp.float32),
        in_specs=[vmem, vmem, vmem, vmem],
        out_specs=vmem,
    )(x_tb, packed["wg"], packed["wv"], packed["reg"])


def gru_forward_ref(x_flat, params, *, input_size, hidden_size, num_layers):
    """Pure-JAX reference matching PyTorch semantics."""
    B, input_dim = x_flat.shape
    n = input_size
    d = input_dim // input_size
    H = hidden_size

    x = x_flat.reshape(B, n, d)
    seq = x @ params["w_emb"].T + params["b_emb"]
    for l in range(num_layers):
        w_ih = params[f"w_ih_l{l}"]; w_hh = params[f"w_hh_l{l}"]
        b_ih = params[f"b_ih_l{l}"]; b_hh = params[f"b_hh_l{l}"]
        h = jnp.zeros((B, H), jnp.float32)
        outs = []
        for t in range(n):
            gi = seq[:, t, :] @ w_ih.T + b_ih
            gh = h @ w_hh.T + b_hh
            r = jax.nn.sigmoid(gi[:, :H] + gh[:, :H])
            z = jax.nn.sigmoid(gi[:, H:2 * H] + gh[:, H:2 * H])
            ng = jnp.tanh(gi[:, 2 * H:] + r * gh[:, 2 * H:])
            h = (1.0 - z) * ng + z * h
            outs.append(h)
        seq = jnp.stack(outs, axis=1)
    feat = seq.reshape(B, n * H)
    return feat @ params["w_reg"].T + params["b_reg"]


def init_params(key, *, input_dim, input_size, hidden_size, num_layers):
    d = input_dim // input_size
    H = hidden_size
    n = input_size
    params = {}

    def uniform(k, shape, bound):
        return jax.random.uniform(k, shape, jnp.float32, -bound, bound)

    keys = jax.random.split(key, 4 + 4 * num_layers)
    ki = iter(keys)

    # patch-embedding Linear(d, d)
    b = 1.0 / np.sqrt(d)
    params["w_emb"] = uniform(next(ki), (d, d), b)
    params["b_emb"] = uniform(next(ki), (d,), b)

    # GRU layers (PyTorch layout: weight_ih (3H, in), weight_hh (3H, H))
    b = 1.0 / np.sqrt(H)
    for l in range(num_layers):
        in_dim = d if l == 0 else H
        params[f"w_ih_l{l}"] = uniform(next(ki), (3 * H, in_dim), b)
        params[f"w_hh_l{l}"] = uniform(next(ki), (3 * H, H), b)
        params[f"b_ih_l{l}"] = uniform(next(ki), (3 * H,), b)
        params[f"b_hh_l{l}"] = uniform(next(ki), (3 * H,), b)

    # reg Linear(n*H, 10)
    b = 1.0 / np.sqrt(n * H)
    params["w_reg"] = uniform(next(ki), (10, n * H), b)
    params["b_reg"] = uniform(next(ki), (10,), b)
    return params


if __name__ == "__main__":
    # Module hyper-parameters (sne=False path).
    INPUT_DIM = 128       # flat input length L
    INPUT_SIZE = 8        # n -> sequence length
    HIDDEN_SIZE = 32      # H
    NUM_LAYERS = 2
    BATCH = 2

    key = jax.random.PRNGKey(0)
    k_x, k_p = jax.random.split(key)
    x = jax.random.normal(k_x, (BATCH, INPUT_DIM), jnp.float32)
    params = init_params(k_p, input_dim=INPUT_DIM, input_size=INPUT_SIZE,
                         hidden_size=HIDDEN_SIZE, num_layers=NUM_LAYERS)

    # One-time host-side packing (outside the per-call path).
    packed = pack_params(params, input_dim=INPUT_DIM, input_size=INPUT_SIZE,
                         hidden_size=HIDDEN_SIZE, num_layers=NUM_LAYERS)

    out = gru_forward_pallas(x, packed, input_size=INPUT_SIZE,
                             hidden_size=HIDDEN_SIZE, num_layers=NUM_LAYERS)
    out = jax.block_until_ready(out)

    ref = gru_forward_ref(x, params, input_size=INPUT_SIZE,
                          hidden_size=HIDDEN_SIZE, num_layers=NUM_LAYERS)
    ref = jax.block_until_ready(ref)

    assert out.shape == (BATCH, 10), out.shape
    # f32 everywhere; small atol headroom for bias pre-summing / fused-contraction
    # reordering vs. the reference's separate dots.
    np.testing.assert_allclose(np.asarray(out), np.asarray(ref),
                               rtol=1e-5, atol=2e-4)
    print("KERNEL_OK")
</pallas_src>

<mosaic_0001>
module attributes {stable_mosaic.version = 11 : i64} {
  func.func @kernel(%arg0: memref<16x16xf32, #tpu.memory_space<vmem>>, %arg1: memref<48x256xf32, #tpu.memory_space<vmem>>, %arg2: memref<64x256xf32, #tpu.memory_space<vmem>>, %arg3: memref<264x10xf32, #tpu.memory_space<vmem>>, %arg4: memref<2x10xf32, #tpu.memory_space<vmem>>) attributes {dimension_semantics = [], scalar_prefetch = 0 : i64, scratch_operands = 0 : i64, tpu.core_type = #tpu.core_type<tc>} {
    %c0 = arith.constant 0 : index
    %c0_0 = arith.constant 0 : index
    %0 = vector.load %arg0[%c0, %c0_0] : memref<16x16xf32, #tpu.memory_space<vmem>>, vector<16x16xf32>
    %c0_1 = arith.constant 0 : index
    %c0_2 = arith.constant 0 : index
    %1 = vector.load %arg1[%c0_1, %c0_2] : memref<48x256xf32, #tpu.memory_space<vmem>>, vector<16x256xf32>
    %2 = vector.extract_strided_slice %1 {offsets = [0, 0], sizes = [16, 16], strides = [1, 1]} : vector<16x256xf32> to vector<16x16xf32>
    %c16 = arith.constant 16 : index
    %c0_3 = arith.constant 0 : index
    %3 = vector.load %arg1[%c16, %c0_3] : memref<48x256xf32, #tpu.memory_space<vmem>>, vector<1x256xf32>
    %4 = vector.extract_strided_slice %3 {offsets = [0, 0], sizes = [1, 16], strides = [1, 1]} : vector<1x256xf32> to vector<1x16xf32>
    %cst = arith.constant dense<0.000000e+00> : vector<16x16xf32>
    %5 = tpu.matmul %0, %2, %cst {dimension_numbers = #tpu.dot_dimension_numbers<[1], [0], [0], [1], [0, 0, 1, 1], [], []>} : vector<16x16xf32>, vector<16x16xf32>, vector<16x16xf32> -> vector<16x16xf32>
    %6 = vector.broadcast %4 : vector<1x16xf32> to vector<16x16xf32>
    %7 = arith.addf %5, %6 : vector<16x16xf32>
    %c24 = arith.constant 24 : index
    %c0_4 = arith.constant 0 : index
    %8 = vector.load %arg1[%c24, %c0_4] : memref<48x256xf32, #tpu.memory_space<vmem>>, vector<16x256xf32>
    %c40 = arith.constant 40 : index
    %c0_5 = arith.constant 0 : index
    %9 = vector.load %arg1[%c40, %c0_5] : memref<48x256xf32, #tpu.memory_space<vmem>>, vector<1x256xf32>
    %cst_6 = arith.constant dense<0.000000e+00> : vector<16x256xf32>
    %10 = tpu.matmul %7, %8, %cst_6 {dimension_numbers = #tpu.dot_dimension_numbers<[1], [0], [0], [1], [0, 0, 1, 1], [], []>} : vector<16x16xf32>, vector<16x256xf32>, vector<16x256xf32> -> vector<16x256xf32>
    %11 = vector.broadcast %9 : vector<1x256xf32> to vector<16x256xf32>
    %12 = arith.addf %10, %11 : vector<16x256xf32>
    %13 = vector.extract_strided_slice %12 {offsets = [0, 0], sizes = [2, 256], strides = [1, 1]} : vector<16x256xf32> to vector<2x256xf32>
    %14 = vector.extract_strided_slice %12 {offsets = [2, 0], sizes = [2, 256], strides = [1, 1]} : vector<16x256xf32> to vector<2x256xf32>
    %15 = vector.extract_strided_slice %12 {offsets = [4, 0], sizes = [2, 256], strides = [1, 1]} : vector<16x256xf32> to vector<2x256xf32>
    %16 = vector.extract_strided_slice %12 {offsets = [6, 0], sizes = [2, 256], strides = [1, 1]} : vector<16x256xf32> to vector<2x256xf32>
    %17 = vector.extract_strided_slice %12 {offsets = [8, 0], sizes = [2, 256], strides = [1, 1]} : vector<16x256xf32> to vector<2x256xf32>
    %18 = vector.extract_strided_slice %12 {offsets = [10, 0], sizes = [2, 256], strides = [1, 1]} : vector<16x256xf32> to vector<2x256xf32>
    %19 = vector.extract_strided_slice %12 {offsets = [12, 0], sizes = [2, 256], strides = [1, 1]} : vector<16x256xf32> to vector<2x256xf32>
    %20 = vector.extract_strided_slice %12 {offsets = [14, 0], sizes = [2, 256], strides = [1, 1]} : vector<16x256xf32> to vector<2x256xf32>
    %c0_7 = arith.constant 0 : index
    %c0_8 = arith.constant 0 : index
    %21 = vector.load %arg2[%c0_7, %c0_8] : memref<64x256xf32, #tpu.memory_space<vmem>>, vector<64x256xf32>
    %22 = tpu.iota {dimensions = array<i32: 1>} : vector<2x64xi32>
    %cst_9 = arith.constant 0.000000e+00 : f32
    %23 = vector.broadcast %cst_9 : f32 to vector<2x64xf32>
    %cst_10 = arith.constant dense<0.000000e+00> : vector<2x256xf32>
    %24 = tpu.matmul %23, %21, %cst_10 {dimension_numbers = #tpu.dot_dimension_numbers<[1], [0], [0], [1], [0, 0, 1, 1], [], []>} : vector<2x64xf32>, vector<64x256xf32>, vector<2x256xf32> -> vector<2x256xf32>
    %25 = arith.addf %24, %13 : vector<2x256xf32>
    %26 = vector.extract_strided_slice %25 {offsets = [0, 0], sizes = [2, 64], strides = [1, 1]} : vector<2x256xf32> to vector<2x64xf32>
    %27 = arith.negf %26 : vector<2x64xf32>
    %28 = math.exp %27 : vector<2x64xf32>
    %cst_11 = arith.constant 1.000000e+00 : f32
    %29 = vector.broadcast %cst_11 : f32 to vector<2x64xf32>
    %30 = arith.addf %29, %28 : vector<2x64xf32>
    %31 = arith.divf %29, %30 : vector<2x64xf32>
    %32 = vector.extract_strided_slice %25 {offsets = [0, 64], sizes = [2, 64], strides = [1, 1]} : vector<2x256xf32> to vector<2x64xf32>
    %33 = arith.negf %32 : vector<2x64xf32>
    %34 = math.exp %33 : vector<2x64xf32>
    %cst_12 = arith.constant 1.000000e+00 : f32
    %35 = vector.broadcast %cst_12 : f32 to vector<2x64xf32>
    %36 = arith.addf %35, %34 : vector<2x64xf32>
    %37 = arith.divf %35, %36 : vector<2x64xf32>
    %38 = vector.extract_strided_slice %25 {offsets = [0, 128], sizes = [2, 64], strides = [1, 1]} : vector<2x256xf32> to vector<2x64xf32>
    %39 = vector.extract_strided_slice %25 {offsets = [0, 192], sizes = [2, 64], strides = [1, 1]} : vector<2x256xf32> to vector<2x64xf32>
    %40 = arith.mulf %31, %39 : vector<2x64xf32>
    %41 = arith.addf %38, %40 : vector<2x64xf32>
    %42 = math.tanh %41 : vector<2x64xf32>
    %cst_13 = arith.constant 1.000000e+00 : f32
    %43 = vector.broadcast %cst_13 : f32 to vector<2x64xf32>
    %44 = arith.subf %43, %37 : vector<2x64xf32>
    %45 = arith.mulf %44, %42 : vector<2x64xf32>
    %46 = arith.mulf %37, %23 : vector<2x64xf32>
    %47 = arith.addf %45, %46 : vector<2x64xf32>
    %c0_i32 = arith.constant 0 : i32
    %48 = vector.broadcast %c0_i32 : i32 to vector<2x64xi32>
    %49 = arith.cmpi sge, %22, %48 : vector<2x64xi32>
    %c32_i32 = arith.constant 32 : i32
    %50 = vector.broadcast %c32_i32 : i32 to vector<2x64xi32>
    %51 = arith.cmpi slt, %22, %50 : vector<2x64xi32>
    %52 = arith.andi %49, %51 : vector<2x64xi1>
    %53 = arith.select %52, %47, %23 : vector<2x64xi1>, vector<2x64xf32>
    %cst_14 = arith.constant dense<0.000000e+00> : vector<2x256xf32>
    %54 = tpu.matmul %53, %21, %cst_14 {dimension_numbers = #tpu.dot_dimension_numbers<[1], [0], [0], [1], [0, 0, 1, 1], [], []>} : vector<2x64xf32>, vector<64x256xf32>, vector<2x256xf32> -> vector<2x256xf32>
    %55 = arith.addf %54, %14 : vector<2x256xf32>
    %56 = vector.extract_strided_slice %55 {offsets = [0, 0], sizes = [2, 64], strides = [1, 1]} : vector<2x256xf32> to vector<2x64xf32>
    %57 = arith.negf %56 : vector<2x64xf32>
    %58 = math.exp %57 : vector<2x64xf32>
    %cst_15 = arith.constant 1.000000e+00 : f32
    %59 = vector.broadcast %cst_15 : f32 to vector<2x64xf32>
    %60 = arith.addf %59, %58 : vector<2x64xf32>
    %61 = arith.divf %59, %60 : vector<2x64xf32>
    %62 = vector.extract_strided_slice %55 {offsets = [0, 64], sizes = [2, 64], strides = [1, 1]} : vector<2x256xf32> to vector<2x64xf32>
    %63 = arith.negf %62 : vector<2x64xf32>
    %64 = math.exp %63 : vector<2x64xf32>
    %cst_16 = arith.constant 1.000000e+00 : f32
    %65 = vector.broadcast %cst_16 : f32 to vector<2x64xf32>
    %66 = arith.addf %65, %64 : vector<2x64xf32>
    %67 = arith.divf %65, %66 : vector<2x64xf32>
    %68 = vector.extract_strided_slice %55 {offsets = [0, 128], sizes = [2, 64], strides = [1, 1]} : vector<2x256xf32> to vector<2x64xf32>
    %69 = vector.extract_strided_slice %55 {offsets = [0, 192], sizes = [2, 64], strides = [1, 1]} : vector<2x256xf32> to vector<2x64xf32>
    %70 = arith.mulf %61, %69 : vector<2x64xf32>
    %71 = arith.addf %68, %70 : vector<2x64xf32>
    %72 = math.tanh %71 : vector<2x64xf32>
    %cst_17 = arith.constant 1.000000e+00 : f32
    %73 = vector.broadcast %cst_17 : f32 to vector<2x64xf32>
    %74 = arith.subf %73, %67 : vector<2x64xf32>
    %75 = arith.mulf %74, %72 : vector<2x64xf32>
    %76 = arith.mulf %67, %53 : vector<2x64xf32>
    %77 = arith.addf %75, %76 : vector<2x64xf32>
    %78 = vector.extract_strided_slice %77 {offsets = [0, 32], sizes = [2, 32], strides = [1, 1]} : vector<2x64xf32> to vector<2x32xf32>
    %cst_18 = arith.constant dense<0.000000e+00> : vector<2x256xf32>
    %79 = tpu.matmul %77, %21, %cst_18 {dimension_numbers = #tpu.dot_dimension_numbers<[1], [0], [0], [1], [0, 0, 1, 1], [], []>} : vector<2x64xf32>, vector<64x256xf32>, vector<2x256xf32> -> vector<2x256xf32>
    %80 = arith.addf %79, %15 : vector<2x256xf32>
    %81 = vector.extract_strided_slice %80 {offsets = [0, 0], sizes = [2, 64], strides = [1, 1]} : vector<2x256xf32> to vector<2x64xf32>
    %82 = arith.negf %81 : vector<2x64xf32>
    %83 = math.exp %82 : vector<2x64xf32>
    %cst_19 = arith.constant 1.000000e+00 : f32
    %84 = vector.broadcast %cst_19 : f32 to vector<2x64xf32>
    %85 = arith.addf %84, %83 : vector<2x64xf32>
    %86 = arith.divf %84, %85 : vector<2x64xf32>
    %87 = vector.extract_strided_slice %80 {offsets = [0, 64], sizes = [2, 64], strides = [1, 1]} : vector<2x256xf32> to vector<2x64xf32>
    %88 = arith.negf %87 : vector<2x64xf32>
    %89 = math.exp %88 : vector<2x64xf32>
    %cst_20 = arith.constant 1.000000e+00 : f32
    %90 = vector.broadcast %cst_20 : f32 to vector<2x64xf32>
    %91 = arith.addf %90, %89 : vector<2x64xf32>
    %92 = arith.divf %90, %91 : vector<2x64xf32>
    %93 = vector.extract_strided_slice %80 {offsets = [0, 128], sizes = [2, 64], strides = [1, 1]} : vector<2x256xf32> to vector<2x64xf32>
    %94 = vector.extract_strided_slice %80 {offsets = [0, 192], sizes = [2, 64], strides = [1, 1]} : vector<2x256xf32> to vector<2x64xf32>
    %95 = arith.mulf %86, %94 : vector<2x64xf32>
    %96 = arith.addf %93, %95 : vector<2x64xf32>
    %97 = math.tanh %96 : vector<2x64xf32>
    %cst_21 = arith.constant 1.000000e+00 : f32
    %98 = vector.broadcast %cst_21 : f32 to vector<2x64xf32>
    %99 = arith.subf %98, %92 : vector<2x64xf32>
    %100 = arith.mulf %99, %97 : vector<2x64xf32>
    %101 = arith.mulf %92, %77 : vector<2x64xf32>
    %102 = arith.addf %100, %101 : vector<2x64xf32>
    %103 = vector.extract_strided_slice %102 {offsets = [0, 32], sizes = [2, 32], strides = [1, 1]} : vector<2x64xf32> to vector<2x32xf32>
    %cst_22 = arith.constant dense<0.000000e+00> : vector<2x256xf32>
    %104 = tpu.matmul %102, %21, %cst_22 {dimension_numbers = #tpu.dot_dimension_numbers<[1], [0], [0], [1], [0, 0, 1, 1], [], []>} : vector<2x64xf32>, vector<64x256xf32>, vector<2x256xf32> -> vector<2x256xf32>
    %105 = arith.addf %104, %16 : vector<2x256xf32>
    %106 = vector.extract_strided_slice %105 {offsets = [0, 0], sizes = [2, 64], strides = [1, 1]} : vector<2x256xf32> to vector<2x64xf32>
    %107 = arith.negf %106 : vector<2x64xf32>
    %108 = math.exp %107 : vector<2x64xf32>
    %cst_23 = arith.constant 1.000000e+00 : f32
    %109 = vector.broadcast %cst_23 : f32 to vector<2x64xf32>
    %110 = arith.addf %109, %108 : vector<2x64xf32>
    %111 = arith.divf %109, %110 : vector<2x64xf32>
    %112 = vector.extract_strided_slice %105 {offsets = [0, 64], sizes = [2, 64], strides = [1, 1]} : vector<2x256xf32> to vector<2x64xf32>
    %113 = arith.negf %112 : vector<2x64xf32>
    %114 = math.exp %113 : vector<2x64xf32>
    %cst_24 = arith.constant 1.000000e+00 : f32
    %115 = vector.broadcast %cst_24 : f32 to vector<2x64xf32>
    %116 = arith.addf %115, %114 : vector<2x64xf32>
    %117 = arith.divf %115, %116 : vector<2x64xf32>
    %118 = vector.extract_strided_slice %105 {offsets = [0, 128], sizes = [2, 64], strides = [1, 1]} : vector<2x256xf32> to vector<2x64xf32>
    %119 = vector.extract_strided_slice %105 {offsets = [0, 192], sizes = [2, 64], strides = [1, 1]} : vector<2x256xf32> to vector<2x64xf32>
    %120 = arith.mulf %111, %119 : vector<2x64xf32>
    %121 = arith.addf %118, %120 : vector<2x64xf32>
    %122 = math.tanh %121 : vector<2x64xf32>
    %cst_25 = arith.constant 1.000000e+00 : f32
    %123 = vector.broadcast %cst_25 : f32 to vector<2x64xf32>
    %124 = arith.subf %123, %117 : vector<2x64xf32>
    %125 = arith.mulf %124, %122 : vector<2x64xf32>
    %126 = arith.mulf %117, %102 : vector<2x64xf32>
    %127 = arith.addf %125, %126 : vector<2x64xf32>
    %128 = vector.extract_strided_slice %127 {offsets = [0, 32], sizes = [2, 32], strides = [1, 1]} : vector<2x64xf32> to vector<2x32xf32>
    %cst_26 = arith.constant dense<0.000000e+00> : vector<2x256xf32>
    %129 = tpu.matmul %127, %21, %cst_26 {dimension_numbers = #tpu.dot_dimension_numbers<[1], [0], [0], [1], [0, 0, 1, 1], [], []>} : vector<2x64xf32>, vector<64x256xf32>, vector<2x256xf32> -> vector<2x256xf32>
    %130 = arith.addf %129, %17 : vector<2x256xf32>
    %131 = vector.extract_strided_slice %130 {offsets = [0, 0], sizes = [2, 64], strides = [1, 1]} : vector<2x256xf32> to vector<2x64xf32>
    %132 = arith.negf %131 : vector<2x64xf32>
    %133 = math.exp %132 : vector<2x64xf32>
    %cst_27 = arith.constant 1.000000e+00 : f32
    %134 = vector.broadcast %cst_27 : f32 to vector<2x64xf32>
    %135 = arith.addf %134, %133 : vector<2x64xf32>
    %136 = arith.divf %134, %135 : vector<2x64xf32>
    %137 = vector.extract_strided_slice %130 {offsets = [0, 64], sizes = [2, 64], strides = [1, 1]} : vector<2x256xf32> to vector<2x64xf32>
    %138 = arith.negf %137 : vector<2x64xf32>
    %139 = math.exp %138 : vector<2x64xf32>
    %cst_28 = arith.constant 1.000000e+00 : f32
    %140 = vector.broadcast %cst_28 : f32 to vector<2x64xf32>
    %141 = arith.addf %140, %139 : vector<2x64xf32>
    %142 = arith.divf %140, %141 : vector<2x64xf32>
    %143 = vector.extract_strided_slice %130 {offsets = [0, 128], sizes = [2, 64], strides = [1, 1]} : vector<2x256xf32> to vector<2x64xf32>
    %144 = vector.extract_strided_slice %130 {offsets = [0, 192], sizes = [2, 64], strides = [1, 1]} : vector<2x256xf32> to vector<2x64xf32>
    %145 = arith.mulf %136, %144 : vector<2x64xf32>
    %146 = arith.addf %143, %145 : vector<2x64xf32>
    %147 = math.tanh %146 : vector<2x64xf32>
    %cst_29 = arith.constant 1.000000e+00 : f32
    %148 = vector.broadcast %cst_29 : f32 to vector<2x64xf32>
    %149 = arith.subf %148, %142 : vector<2x64xf32>
    %150 = arith.mulf %149, %147 : vector<2x64xf32>
    %151 = arith.mulf %142, %127 : vector<2x64xf32>
    %152 = arith.addf %150, %151 : vector<2x64xf32>
    %153 = vector.extract_strided_slice %152 {offsets = [0, 32], sizes = [2, 32], strides = [1, 1]} : vector<2x64xf32> to vector<2x32xf32>
    %cst_30 = arith.constant dense<0.000000e+00> : vector<2x256xf32>
    %154 = tpu.matmul %152, %21, %cst_30 {dimension_numbers = #tpu.dot_dimension_numbers<[1], [0], [0], [1], [0, 0, 1, 1], [], []>} : vector<2x64xf32>, vector<64x256xf32>, vector<2x256xf32> -> vector<2x256xf32>
    %155 = arith.addf %154, %18 : vector<2x256xf32>
    %156 = vector.extract_strided_slice %155 {offsets = [0, 0], sizes = [2, 64], strides = [1, 1]} : vector<2x256xf32> to vector<2x64xf32>
    %157 = arith.negf %156 : vector<2x64xf32>
    %158 = math.exp %157 : vector<2x64xf32>
    %cst_31 = arith.constant 1.000000e+00 : f32
    %159 = vector.broadcast %cst_31 : f32 to vector<2x64xf32>
    %160 = arith.addf %159, %158 : vector<2x64xf32>
    %161 = arith.divf %159, %160 : vector<2x64xf32>
    %162 = vector.extract_strided_slice %155 {offsets = [0, 64], sizes = [2, 64], strides = [1, 1]} : vector<2x256xf32> to vector<2x64xf32>
    %163 = arith.negf %162 : vector<2x64xf32>
    %164 = math.exp %163 : vector<2x64xf32>
    %cst_32 = arith.constant 1.000000e+00 : f32
    %165 = vector.broadcast %cst_32 : f32 to vector<2x64xf32>
    %166 = arith.addf %165, %164 : vector<2x64xf32>
    %167 = arith.divf %165, %166 : vector<2x64xf32>
    %168 = vector.extract_strided_slice %155 {offsets = [0, 128], sizes = [2, 64], strides = [1, 1]} : vector<2x256xf32> to vector<2x64xf32>
    %169 = vector.extract_strided_slice %155 {offsets = [0, 192], sizes = [2, 64], strides = [1, 1]} : vector<2x256xf32> to vector<2x64xf32>
    %170 = arith.mulf %161, %169 : vector<2x64xf32>
    %171 = arith.addf %168, %170 : vector<2x64xf32>
    %172 = math.tanh %171 : vector<2x64xf32>
    %cst_33 = arith.constant 1.000000e+00 : f32
    %173 = vector.broadcast %cst_33 : f32 to vector<2x64xf32>
    %174 = arith.subf %173, %167 : vector<2x64xf32>
    %175 = arith.mulf %174, %172 : vector<2x64xf32>
    %176 = arith.mulf %167, %152 : vector<2x64xf32>
    %177 = arith.addf %175, %176 : vector<2x64xf32>
    %178 = vector.extract_strided_slice %177 {offsets = [0, 32], sizes = [2, 32], strides = [1, 1]} : vector<2x64xf32> to vector<2x32xf32>
    %cst_34 = arith.constant dense<0.000000e+00> : vector<2x256xf32>
    %179 = tpu.matmul %177, %21, %cst_34 {dimension_numbers = #tpu.dot_dimension_numbers<[1], [0], [0], [1], [0, 0, 1, 1], [], []>} : vector<2x64xf32>, vector<64x256xf32>, vector<2x256xf32> -> vector<2x256xf32>
    %180 = arith.addf %179, %19 : vector<2x256xf32>
    %181 = vector.extract_strided_slice %180 {offsets = [0, 0], sizes = [2, 64], strides = [1, 1]} : vector<2x256xf32> to vector<2x64xf32>
    %182 = arith.negf %181 : vector<2x64xf32>
    %183 = math.exp %182 : vector<2x64xf32>
    %cst_35 = arith.constant 1.000000e+00 : f32
    %184 = vector.broadcast %cst_35 : f32 to vector<2x64xf32>
    %185 = arith.addf %184, %183 : vector<2x64xf32>
    %186 = arith.divf %184, %185 : vector<2x64xf32>
    %187 = vector.extract_strided_slice %180 {offsets = [0, 64], sizes = [2, 64], strides = [1, 1]} : vector<2x256xf32> to vector<2x64xf32>
    %188 = arith.negf %187 : vector<2x64xf32>
    %189 = math.exp %188 : vector<2x64xf32>
    %cst_36 = arith.constant 1.000000e+00 : f32
    %190 = vector.broadcast %cst_36 : f32 to vector<2x64xf32>
    %191 = arith.addf %190, %189 : vector<2x64xf32>
    %192 = arith.divf %190, %191 : vector<2x64xf32>
    %193 = vector.extract_strided_slice %180 {offsets = [0, 128], sizes = [2, 64], strides = [1, 1]} : vector<2x256xf32> to vector<2x64xf32>
    %194 = vector.extract_strided_slice %180 {offsets = [0, 192], sizes = [2, 64], strides = [1, 1]} : vector<2x256xf32> to vector<2x64xf32>
    %195 = arith.mulf %186, %194 : vector<2x64xf32>
    %196 = arith.addf %193, %195 : vector<2x64xf32>
    %197 = math.tanh %196 : vector<2x64xf32>
    %cst_37 = arith.constant 1.000000e+00 : f32
    %198 = vector.broadcast %cst_37 : f32 to vector<2x64xf32>
    %199 = arith.subf %198, %192 : vector<2x64xf32>
    %200 = arith.mulf %199, %197 : vector<2x64xf32>
    %201 = arith.mulf %192, %177 : vector<2x64xf32>
    %202 = arith.addf %200, %201 : vector<2x64xf32>
    %203 = vector.extract_strided_slice %202 {offsets = [0, 32], sizes = [2, 32], strides = [1, 1]} : vector<2x64xf32> to vector<2x32xf32>
    %cst_38 = arith.constant dense<0.000000e+00> : vector<2x256xf32>
    %204 = tpu.matmul %202, %21, %cst_38 {dimension_numbers = #tpu.dot_dimension_numbers<[1], [0], [0], [1], [0, 0, 1, 1], [], []>} : vector<2x64xf32>, vector<64x256xf32>, vector<2x256xf32> -> vector<2x256xf32>
    %205 = arith.addf %204, %20 : vector<2x256xf32>
    %206 = vector.extract_strided_slice %205 {offsets = [0, 0], sizes = [2, 64], strides = [1, 1]} : vector<2x256xf32> to vector<2x64xf32>
    %207 = arith.negf %206 : vector<2x64xf32>
    %208 = math.exp %207 : vector<2x64xf32>
    %cst_39 = arith.constant 1.000000e+00 : f32
    %209 = vector.broadcast %cst_39 : f32 to vector<2x64xf32>
    %210 = arith.addf %209, %208 : vector<2x64xf32>
    %211 = arith.divf %209, %210 : vector<2x64xf32>
    %212 = vector.extract_strided_slice %205 {offsets = [0, 64], sizes = [2, 64], strides = [1, 1]} : vector<2x256xf32> to vector<2x64xf32>
    %213 = arith.negf %212 : vector<2x64xf32>
    %214 = math.exp %213 : vector<2x64xf32>
    %cst_40 = arith.constant 1.000000e+00 : f32
    %215 = vector.broadcast %cst_40 : f32 to vector<2x64xf32>
    %216 = arith.addf %215, %214 : vector<2x64xf32>
    %217 = arith.divf %215, %216 : vector<2x64xf32>
    %218 = vector.extract_strided_slice %205 {offsets = [0, 128], sizes = [2, 64], strides = [1, 1]} : vector<2x256xf32> to vector<2x64xf32>
    %219 = vector.extract_strided_slice %205 {offsets = [0, 192], sizes = [2, 64], strides = [1, 1]} : vector<2x256xf32> to vector<2x64xf32>
    %220 = arith.mulf %211, %219 : vector<2x64xf32>
    %221 = arith.addf %218, %220 : vector<2x64xf32>
    %222 = math.tanh %221 : vector<2x64xf32>
    %cst_41 = arith.constant 1.000000e+00 : f32
    %223 = vector.broadcast %cst_41 : f32 to vector<2x64xf32>
    %224 = arith.subf %223, %217 : vector<2x64xf32>
    %225 = arith.mulf %224, %222 : vector<2x64xf32>
    %226 = arith.mulf %217, %202 : vector<2x64xf32>
    %227 = arith.addf %225, %226 : vector<2x64xf32>
    %228 = vector.extract_strided_slice %227 {offsets = [0, 32], sizes = [2, 32], strides = [1, 1]} : vector<2x64xf32> to vector<2x32xf32>
    %cst_42 = arith.constant dense<0.000000e+00> : vector<2x256xf32>
    %229 = tpu.matmul %227, %21, %cst_42 {dimension_numbers = #tpu.dot_dimension_numbers<[1], [0], [0], [1], [0, 0, 1, 1], [], []>} : vector<2x64xf32>, vector<64x256xf32>, vector<2x256xf32> -> vector<2x256xf32>
    %230 = arith.addf %229, %20 : vector<2x256xf32>
    %231 = vector.extract_strided_slice %230 {offsets = [0, 0], sizes = [2, 64], strides = [1, 1]} : vector<2x256xf32> to vector<2x64xf32>
    %232 = arith.negf %231 : vector<2x64xf32>
    %233 = math.exp %232 : vector<2x64xf32>
    %cst_43 = arith.constant 1.000000e+00 : f32
    %234 = vector.broadcast %cst_43 : f32 to vector<2x64xf32>
    %235 = arith.addf %234, %233 : vector<2x64xf32>
    %236 = arith.divf %234, %235 : vector<2x64xf32>
    %237 = vector.extract_strided_slice %230 {offsets = [0, 64], sizes = [2, 64], strides = [1, 1]} : vector<2x256xf32> to vector<2x64xf32>
    %238 = arith.negf %237 : vector<2x64xf32>
    %239 = math.exp %238 : vector<2x64xf32>
    %cst_44 = arith.constant 1.000000e+00 : f32
    %240 = vector.broadcast %cst_44 : f32 to vector<2x64xf32>
    %241 = arith.addf %240, %239 : vector<2x64xf32>
    %242 = arith.divf %240, %241 : vector<2x64xf32>
    %243 = vector.extract_strided_slice %230 {offsets = [0, 128], sizes = [2, 64], strides = [1, 1]} : vector<2x256xf32> to vector<2x64xf32>
    %244 = vector.extract_strided_slice %230 {offsets = [0, 192], sizes = [2, 64], strides = [1, 1]} : vector<2x256xf32> to vector<2x64xf32>
    %245 = arith.mulf %236, %244 : vector<2x64xf32>
    %246 = arith.addf %243, %245 : vector<2x64xf32>
    %247 = math.tanh %246 : vector<2x64xf32>
    %cst_45 = arith.constant 1.000000e+00 : f32
    %248 = vector.broadcast %cst_45 : f32 to vector<2x64xf32>
    %249 = arith.subf %248, %242 : vector<2x64xf32>
    %250 = arith.mulf %249, %247 : vector<2x64xf32>
    %251 = arith.mulf %242, %227 : vector<2x64xf32>
    %252 = arith.addf %250, %251 : vector<2x64xf32>
    %c32_i32_46 = arith.constant 32 : i32
    %253 = vector.broadcast %c32_i32_46 : i32 to vector<2x64xi32>
    %254 = arith.cmpi sge, %22, %253 : vector<2x64xi32>
    %c64_i32 = arith.constant 64 : i32
    %255 = vector.broadcast %c64_i32 : i32 to vector<2x64xi32>
    %256 = arith.cmpi slt, %22, %255 : vector<2x64xi32>
    %257 = arith.andi %254, %256 : vector<2x64xi1>
    %258 = arith.select %257, %252, %227 : vector<2x64xi1>, vector<2x64xf32>
    %259 = vector.extract_strided_slice %258 {offsets = [0, 32], sizes = [2, 32], strides = [1, 1]} : vector<2x64xf32> to vector<2x32xf32>
    %260 = tpu.concatenate %78, %103, %128, %153, %178, %203, %228, %259 in 1 : vector<2x32xf32>, vector<2x32xf32>, vector<2x32xf32>, vector<2x32xf32>, vector<2x32xf32>, vector<2x32xf32>, vector<2x32xf32>, vector<2x32xf32> -> vector<2x256xf32>
    %c0_47 = arith.constant 0 : index
    %c0_48 = arith.constant 0 : index
    %261 = vector.load %arg3[%c0_47, %c0_48] : memref<264x10xf32, #tpu.memory_space<vmem>>, vector<256x10xf32>
    %cst_49 = arith.constant dense<0.000000e+00> : vector<2x10xf32>
    %262 = tpu.matmul %260, %261, %cst_49 {dimension_numbers = #tpu.dot_dimension_numbers<[1], [0], [0], [1], [0, 0, 1, 1], [], []>} : vector<2x256xf32>, vector<256x10xf32>, vector<2x10xf32> -> vector<2x10xf32>
    %c256 = arith.constant 256 : index
    %c0_50 = arith.constant 0 : index
    %263 = vector.load %arg3[%c256, %c0_50] : memref<264x10xf32, #tpu.memory_space<vmem>>, vector<1x10xf32>
    %264 = vector.broadcast %263 : vector<1x10xf32> to vector<2x10xf32>
    %265 = arith.addf %262, %264 : vector<2x10xf32>
    %c0_51 = arith.constant 0 : index
    %c0_52 = arith.constant 0 : index
    %266 = vector.load %arg4[%c0_51, %c0_52] : memref<2x10xf32, #tpu.memory_space<vmem>>, vector<2x10xf32>
    tpu.vector_store %arg4[%c0_51, %c0_52], %265 {strides = array<i32>} : memref<2x10xf32, #tpu.memory_space<vmem>>, vector<2x10xf32>,
    return
  }
}

</mosaic_0001>

<llo_original>
// kernel: tpu_custom_call.1
$region0: #{tpu_custom_call.1}
  #allocation0 [shape = 'u32[]', space=smem, size = 0x4, offset = 0x4, fixed_abs, tag = 'smem constant byte address 0x4 - core index']
  #allocation1 [shape = 'u32[72,128]{1,0:T(1,128)}', space=vmem, size = 0x9000, scoped, tag = 'internal scratch']
  %s0 = inlined_call_operand.vmem [shape: f32[16,16], index: 0, kind: input, shape index: {}]
  %s1 = inlined_call_operand.vmem [shape: f32[48,256], index: 1, kind: input, shape index: {}]
  %s2 = inlined_call_operand.vmem [shape: f32[64,256], index: 2, kind: input, shape index: {}]
  %s3 = inlined_call_operand.vmem [shape: f32[264,10], index: 3, kind: input, shape index: {}]
  %s4 = inlined_call_operand.hbm [shape: f32[2,10], index: 4, kind: output, shape index: {}]
  %s5 = sld [smem:[#allocation0]]
  $region26: #{tpu_custom_call.1} parent=0
    _
  %s7 = ssub.s32 1, %s5
  %s8 = scalar_select 0, %s7, %s5
  $region1: #{tpu_custom_call.1} parent=0
    #allocation2 [shape = 'u8[1024]{0}', space=vmem, size = 0x400, scoped, tag = 'output window, operand 0, single buffered']
    #allocation3 [shape = 's32[1]{0}', space=sflag, size = 0x4, scoped, tag = 'scoped memory for tpu_custom_call.1']
    %9 = vsyncpa [#allocation3], 0
    // Predicated region
    $region2: #{tpu_custom_call.1} parent=1 // pred_check
      _
    $region3: #{tpu_custom_call.1} parent=1 // pred_check_branch
      %11 = sbr.rel (0) target = $region5
    $region4: #{tpu_custom_call.1} parent=1 // pred_region
      _
    $region5: #{tpu_custom_call.1} parent=1 // pred_fallthru
      _
    // Predicated region
    $region6: #{tpu_custom_call.1} parent=1 // pred_check
      _
    $region7: #{tpu_custom_call.1} parent=1 // pred_check_branch
      %13 = sbr.rel (0) target = $region9
    $region8: #{tpu_custom_call.1} parent=1 // pred_region
      _
    $region9: #{tpu_custom_call.1} parent=1 // pred_fallthru
      _
    // Predicated region
    $region10: #{tpu_custom_call.1} parent=1 // pred_check
      _
    $region11: #{tpu_custom_call.1} parent=1 // pred_check_branch
      %15 = sbr.rel (0) target = $region13
    $region12: #{tpu_custom_call.1} parent=1 // pred_region
      _
    $region13: #{tpu_custom_call.1} parent=1 // pred_fallthru
      _
    // Predicated region
    $region14: #{tpu_custom_call.1} parent=1 // pred_check
      _
    $region15: #{tpu_custom_call.1} parent=1 // pred_check_branch
      %17 = sbr.rel (0) target = $region17
    $region16: #{tpu_custom_call.1} parent=1 // pred_region
      _
    $region17: #{tpu_custom_call.1} parent=1 // pred_fallthru
      _
    %v18 = vld [vmem:[%s0] sm:$0xff]
    %v19 = vld [vmem:[%s0 + $0x8] sm:$0xff]
    %v20 = vld [vmem:[%s1] sm:$0xff]
    %v21 = vld [vmem:[%s1 + $0x10] sm:$0xff]
    %s22 = scalar_lea.vmem %s1, 32
    %v23 = vld [vmem:[%s22] ss:$8 sm:$0x3]
    %v25 = vperm.slane %v23, 0
    %vm27 = vcmask 130048
    %v29 = vsel %vm27, %v18, 0
    %v32 = vsel %vm27, %v19, 0
    %34 = vmatpush.msra.mxu0 0.0
    %35 = vmatpush.msra.mxu0 0.0
    %36 = vmatpush.msra.mxu0 0.0
    %37 = vmatpush.msra.mxu0 0.0
    %38 = vmatpush.msra.mxu0 0.0
    %39 = vmatpush.msra.mxu0 0.0
    %40 = vmatpush.msra.mxu0 0.0
    %41 = vmatpush.msra.mxu0 0.0
    %42 = vmatpush.msra.mxu0 0.0
    %43 = vmatpush.msra.mxu0 0.0
    %44 = vmatpush.msra.mxu0 0.0
    %45 = vmatpush.msra.mxu0 0.0
    %46 = vmatpush.msra.mxu0 0.0
    %47 = vmatpush.msra.mxu0 0.0
    %48 = vmatpush.msra.mxu0 %v21
    %49 = vmatpush.msra.mxu0 %v20
    %50 = vmatmul.f32.gmra.mxu0 %v29
    %v51 = vpop.f32.mrf.mxu0
    %v52 = vadd.f32 %v25, %v51
    %53 = vmatmul.f32.gmra.mxu0 %v32
    %v54 = vpop.f32.mrf.mxu0
    %v55 = vadd.f32 %v25, %v54
    %56 = vdwg.mxu0
    %v57 = vld [vmem:[%s1 + $0x30] sm:$0xff]
    %v58 = vld [vmem:[%s1 + $0x38] sm:$0xff]
    %v59 = vld [vmem:[%s1 + $0x40] sm:$0xff]
    %v60 = vld [vmem:[%s1 + $0x48] sm:$0xff]
    %s61 = scalar_lea.vmem %s1, 80
    %v62 = vld [vmem:[%s61] ss:$8 sm:$0x3]
    %v64 = vperm.slane %v62, 0
    %v65 = vperm.slane %v62, 1
    %v69 = vsel %vm27, %v52, 0
    %v72 = vsel %vm27, %v55, 0
    %74 = vmatpush.msra.mxu0 0.0
    %75 = vmatpush.msra.mxu0 0.0
    %76 = vmatpush.msra.mxu0 0.0
    %77 = vmatpush.msra.mxu0 0.0
    %78 = vmatpush.msra.mxu0 0.0
    %79 = vmatpush.msra.mxu0 0.0
    %80 = vmatpush.msra.mxu0 0.0
    %81 = vmatpush.msra.mxu0 0.0
    %82 = vmatpush.msra.mxu0 0.0
    %83 = vmatpush.msra.mxu0 0.0
    %84 = vmatpush.msra.mxu0 0.0
    %85 = vmatpush.msra.mxu0 0.0
    %86 = vmatpush.msra.mxu0 0.0
    %87 = vmatpush.msra.mxu0 0.0
    %88 = vmatpush.msra.mxu0 %v59
    %89 = vmatpush.msra.mxu0 %v57
    %90 = vmatmul.f32.gmra.mxu0 %v69
    %v91 = vpop.f32.mrf.mxu0
    %v92 = vadd.f32 %v64, %v91
    %93 = vmatmul.f32.gmra.mxu0 %v72
    %v94 = vpop.f32.mrf.mxu0
    %v95 = vadd.f32 %v64, %v94
    %96 = vdwg.mxu0
    %97 = vmatpush.msra.mxu0 0.0
    %98 = vmatpush.msra.mxu0 0.0
    %99 = vmatpush.msra.mxu0 0.0
    %100 = vmatpush.msra.mxu0 0.0
    %101 = vmatpush.msra.mxu0 0.0
    %102 = vmatpush.msra.mxu0 0.0
    %103 = vmatpush.msra.mxu0 0.0
    %104 = vmatpush.msra.mxu0 0.0
    %105 = vmatpush.msra.mxu0 0.0
    %106 = vmatpush.msra.mxu0 0.0
    %107 = vmatpush.msra.mxu0 0.0
    %108 = vmatpush.msra.mxu0 0.0
    %109 = vmatpush.msra.mxu0 0.0
    %110 = vmatpush.msra.mxu0 0.0
    %111 = vmatpush.msra.mxu0 %v60
    %112 = vmatpush.msra.mxu0 %v58
    %113 = vmatmul.f32.gmra.mxu0 %v69
    %v114 = vpop.f32.mrf.mxu0
    %v115 = vadd.f32 %v65, %v114
    %116 = vmatmul.f32.gmra.mxu0 %v72
    %v117 = vpop.f32.mrf.mxu0
    %v118 = vadd.f32 %v65, %v117
    %119 = vdwg.mxu0
    %v120 = vld [vmem:[%s2] sm:$0xff]
    %v121 = vld [vmem:[%s2 + $0x8] sm:$0xff]
    %v122 = vld [vmem:[%s2 + $0x10] sm:$0xff]
    %v123 = vld [vmem:[%s2 + $0x18] sm:$0xff]
    %v124 = vld [vmem:[%s2 + $0x20] sm:$0xff]
    %v125 = vld [vmem:[%s2 + $0x28] sm:$0xff]
    %v126 = vld [vmem:[%s2 + $0x30] sm:$0xff]
    %v127 = vld [vmem:[%s2 + $0x38] sm:$0xff]
    %v128 = vld [vmem:[%s2 + $0x40] sm:$0xff]
    %v129 = vld [vmem:[%s2 + $0x48] sm:$0xff]
    %v130 = vld [vmem:[%s2 + $0x50] sm:$0xff]
    %v131 = vld [vmem:[%s2 + $0x58] sm:$0xff]
    %v132 = vld [vmem:[%s2 + $0x60] sm:$0xff]
    %v133 = vld [vmem:[%s2 + $0x68] sm:$0xff]
    %v134 = vld [vmem:[%s2 + $0x70] sm:$0xff]
    %v135 = vld [vmem:[%s2 + $0x78] sm:$0xff]
    %v136 = vlaneseq
    %v137 = vand.u32 %v136, 127
    %vm138 = vcmask 523264
    %v140 = vsel %vm138, 0.0, 0
    %142 = vmatpush.msra.mxu0 0.0
    %143 = vmatpush.msra.mxu0 0.0
    %144 = vmatpush.msra.mxu0 0.0
    %145 = vmatpush.msra.mxu0 0.0
    %146 = vmatpush.msra.mxu0 0.0
    %147 = vmatpush.msra.mxu0 0.0
    %148 = vmatpush.msra.mxu0 0.0
    %149 = vmatpush.msra.mxu0 0.0
    %150 = vmatpush.msra.mxu0 %v134
    %151 = vmatpush.msra.mxu0 %v132
    %152 = vmatpush.msra.mxu0 %v130
    %153 = vmatpush.msra.mxu0 %v128
    %154 = vmatpush.msra.mxu0 %v126
    %155 = vmatpush.msra.mxu0 %v124
    %156 = vmatpush.msra.mxu0 %v122
    %157 = vmatpush.msra.mxu0 %v120
    %158 = vmatmul.f32.gmra.mxu0 %v140
    %v159 = vpop.f32.mrf.mxu0
    %v160 = vadd.f32 %v92, %v159
    %161 = vdwg.mxu0
    %162 = vmatpush.msra.mxu0 0.0
    %163 = vmatpush.msra.mxu0 0.0
    %164 = vmatpush.msra.mxu0 0.0
    %165 = vmatpush.msra.mxu0 0.0
    %166 = vmatpush.msra.mxu0 0.0
    %167 = vmatpush.msra.mxu0 0.0
    %168 = vmatpush.msra.mxu0 0.0
    %169 = vmatpush.msra.mxu0 0.0
    %170 = vmatpush.msra.mxu0 %v135
    %171 = vmatpush.msra.mxu0 %v133
    %172 = vmatpush.msra.mxu0 %v131
    %173 = vmatpush.msra.mxu0 %v129
    %174 = vmatpush.msra.mxu0 %v127
    %175 = vmatpush.msra.mxu0 %v125
    %176 = vmatpush.msra.mxu0 %v123
    %177 = vmatpush.msra.mxu0 %v121
    %178 = vmatmul.f32.gmra.mxu0 %v140
    %v179 = vpop.f32.mrf.mxu0
    %v180 = vadd.f32 %v115, %v179
    %181 = vdwg.mxu0
    %v182 = vxor.u32 %v160, 2147483648
    %v183 = vmul.f32 %v182, 1.442695
    %v184 = vpow.pop %v183
    %v185 = vadd.f32 %v184, 1.0
    %v186 = vrcp.pop %v185
    %v187 = vmul.f32 %v185, %v186
    %v188 = vsub.f32 1.0, %v187
    %v189 = vmul.f32 %v186, %v188
    %v190 = vadd.f32 %v186, %v189
    %vm191 = vweird.f32 %v185
    %vm192 = vweird.f32 %v186
    %vm193 = vmor %vm191, %vm192
    %v194 = vsel %vm193, %v186, %v190
    %v195 = vand.u32 2147483647, %v185
    %vm196 = vcmp.eq.f32.partialorder %v195, 8.507059e+37
    %v197 = vand.u32 %v185, 2147483648
    %v198 = vor.u32 1.1754944e-38, %v197
    %v199 = vsel %vm196, %v198, %v194
    %v200 = vmul.f32 1.0, %v199
    %202 = vrot.lane.b32.xlu0 %v180, 64
    %v203 = vpop.permute.xlu0 %202
    %v205 = vmul.f32 %v200, %v203
    %v206 = vadd.f32 %v180, %v205
    %v207 = vtanh.pop %v206
    %v208 = vsub.f32 1.0, %v200
    %210 = vrot.lane.b32.xlu0 %v207, 64
    %v211 = vpop.permute.xlu0 %210
    %v213 = vmul.f32 %v208, %v211
    %v214 = vmul.f32 %v200, 0.0
    %v215 = vadd.f32 %v213, %v214
    %vm216 = vcmp.ge.s32.totalorder %v137, 0
    %vm217 = vcmp.lt.s32.totalorder %v137, 32
    %vm218 = vmand %vm216, %vm217
    %220 = vrot.lane.b32.xlu0 %v215, 64
    %v221 = vpop.permute.xlu0 %220
    %v223 = vsel %vm218, %v221, 0.0
    %v226 = vrot.slane %v92, 2
    %v227 = vrot.slane %v115, 2
    %v231 = vsel %vm138, %v223, 0
    %233 = vmatpush.msra.mxu0 0.0
    %234 = vmatpush.msra.mxu0 0.0
    %235 = vmatpush.msra.mxu0 0.0
    %236 = vmatpush.msra.mxu0 0.0
    %237 = vmatpush.msra.mxu0 0.0
    %238 = vmatpush.msra.mxu0 0.0
    %239 = vmatpush.msra.mxu0 0.0
    %240 = vmatpush.msra.mxu0 0.0
    %241 = vmatpush.msra.mxu0 %v134
    %242 = vmatpush.msra.mxu0 %v132
    %243 = vmatpush.msra.mxu0 %v130
    %244 = vmatpush.msra.mxu0 %v128
    %245 = vmatpush.msra.mxu0 %v126
    %246 = vmatpush.msra.mxu0 %v124
    %247 = vmatpush.msra.mxu0 %v122
    %248 = vmatpush.msra.mxu0 %v120
    %249 = vmatmul.f32.gmra.mxu0 %v231
    %v250 = vpop.f32.mrf.mxu0
    %v251 = vadd.f32 %v226, %v250
    %252 = vdwg.mxu0
    %253 = vmatpush.msra.mxu0 0.0
    %254 = vmatpush.msra.mxu0 0.0
    %255 = vmatpush.msra.mxu0 0.0
    %256 = vmatpush.msra.mxu0 0.0
    %257 = vmatpush.msra.mxu0 0.0
    %258 = vmatpush.msra.mxu0 0.0
    %259 = vmatpush.msra.mxu0 0.0
    %260 = vmatpush.msra.mxu0 0.0
    %261 = vmatpush.msra.mxu0 %v135
    %262 = vmatpush.msra.mxu0 %v133
    %263 = vmatpush.msra.mxu0 %v131
    %264 = vmatpush.msra.mxu0 %v129
    %265 = vmatpush.msra.mxu0 %v127
    %266 = vmatpush.msra.mxu0 %v125
    %267 = vmatpush.msra.mxu0 %v123
    %268 = vmatpush.msra.mxu0 %v121
    %269 = vmatmul.f32.gmra.mxu0 %v231
    %v270 = vpop.f32.mrf.mxu0
    %v271 = vadd.f32 %v227, %v270
    %272 = vdwg.mxu0
    %v273 = vxor.u32 %v251, 2147483648
    %v274 = vmul.f32 %v273, 1.442695
    %v275 = vpow.pop %v274
    %v276 = vadd.f32 %v275, 1.0
    %v277 = vrcp.pop %v276
    %v278 = vmul.f32 %v276, %v277
    %v279 = vsub.f32 1.0, %v278
    %v280 = vmul.f32 %v277, %v279
    %v281 = vadd.f32 %v277, %v280
    %vm282 = vweird.f32 %v276
    %vm283 = vweird.f32 %v277
    %vm284 = vmor %vm282, %vm283
    %v285 = vsel %vm284, %v277, %v281
    %v286 = vand.u32 2147483647, %v276
    %vm287 = vcmp.eq.f32.partialorder %v286, 8.507059e+37
    %v288 = vand.u32 %v276, 2147483648
    %v289 = vor.u32 1.1754944e-38, %v288
    %v290 = vsel %vm287, %v289, %v285
    %v291 = vmul.f32 1.0, %v290
    %293 = vrot.lane.b32.xlu0 %v271, 64
    %v294 = vpop.permute.xlu0 %293
    %v296 = vmul.f32 %v291, %v294
    %v297 = vadd.f32 %v271, %v296
    %v298 = vtanh.pop %v297
    %v299 = vsub.f32 1.0, %v291
    %301 = vrot.lane.b32.xlu0 %v298, 64
    %v302 = vpop.permute.xlu0 %301
    %v304 = vmul.f32 %v299, %v302
    %305 = vrot.lane.b32.xlu0 %v223, 64
    %v306 = vpop.permute.xlu0 %305
    %v308 = vmul.f32 %v291, %v306
    %v309 = vadd.f32 %v304, %v308
    %311 = vrot.lane.b32.xlu0 %v309, 64
    %v312 = vpop.permute.xlu0 %311
    %v313 = vrot.slane %v92, 4
    %v314 = vrot.slane %v115, 4
    %v317 = vsel %vm138, %v312, 0
    %319 = vmatpush.msra.mxu0 0.0
    %320 = vmatpush.msra.mxu0 0.0
    %321 = vmatpush.msra.mxu0 0.0
    %322 = vmatpush.msra.mxu0 0.0
    %323 = vmatpush.msra.mxu0 0.0
    %324 = vmatpush.msra.mxu0 0.0
    %325 = vmatpush.msra.mxu0 0.0
    %326 = vmatpush.msra.mxu0 0.0
    %327 = vmatpush.msra.mxu0 %v134
    %328 = vmatpush.msra.mxu0 %v132
    %329 = vmatpush.msra.mxu0 %v130
    %330 = vmatpush.msra.mxu0 %v128
    %331 = vmatpush.msra.mxu0 %v126
    %332 = vmatpush.msra.mxu0 %v124
    %333 = vmatpush.msra.mxu0 %v122
    %334 = vmatpush.msra.mxu0 %v120
    %335 = vmatmul.f32.gmra.mxu0 %v317
    %v336 = vpop.f32.mrf.mxu0
    %v337 = vadd.f32 %v313, %v336
    %338 = vdwg.mxu0
    %339 = vmatpush.msra.mxu0 0.0
    %340 = vmatpush.msra.mxu0 0.0
    %341 = vmatpush.msra.mxu0 0.0
    %342 = vmatpush.msra.mxu0 0.0
    %343 = vmatpush.msra.mxu0 0.0
    %344 = vmatpush.msra.mxu0 0.0
    %345 = vmatpush.msra.mxu0 0.0
    %346 = vmatpush.msra.mxu0 0.0
    %347 = vmatpush.msra.mxu0 %v135
    %348 = vmatpush.msra.mxu0 %v133
    %349 = vmatpush.msra.mxu0 %v131
    %350 = vmatpush.msra.mxu0 %v129
    %351 = vmatpush.msra.mxu0 %v127
    %352 = vmatpush.msra.mxu0 %v125
    %353 = vmatpush.msra.mxu0 %v123
    %354 = vmatpush.msra.mxu0 %v121
    %355 = vmatmul.f32.gmra.mxu0 %v317
    %v356 = vpop.f32.mrf.mxu0
    %v357 = vadd.f32 %v314, %v356
    %358 = vdwg.mxu0
    %v359 = vxor.u32 %v337, 2147483648
    %v360 = vmul.f32 %v359, 1.442695
    %v361 = vpow.pop %v360
    %v362 = vadd.f32 %v361, 1.0
    %v363 = vrcp.pop %v362
    %v364 = vmul.f32 %v362, %v363
    %v365 = vsub.f32 1.0, %v364
    %v366 = vmul.f32 %v363, %v365
    %v367 = vadd.f32 %v363, %v366
    %vm368 = vweird.f32 %v362
    %vm369 = vweird.f32 %v363
    %vm370 = vmor %vm368, %vm369
    %v371 = vsel %vm370, %v363, %v367
    %v372 = vand.u32 2147483647, %v362
    %vm373 = vcmp.eq.f32.partialorder %v372, 8.507059e+37
    %v374 = vand.u32 %v362, 2147483648
    %v375 = vor.u32 1.1754944e-38, %v374
    %v376 = vsel %vm373, %v375, %v371
    %v377 = vmul.f32 1.0, %v376
    %379 = vrot.lane.b32.xlu0 %v357, 64
    %v380 = vpop.permute.xlu0 %379
    %v382 = vmul.f32 %v377, %v380
    %v383 = vadd.f32 %v357, %v382
    %v384 = vtanh.pop %v383
    %v385 = vsub.f32 1.0, %v377
    %387 = vrot.lane.b32.xlu0 %v384, 64
    %v388 = vpop.permute.xlu0 %387
    %v390 = vmul.f32 %v385, %v388
    %v391 = vmul.f32 %v377, %v309
    %v392 = vadd.f32 %v390, %v391
    %394 = vrot.lane.b32.xlu0 %v392, 64
    %v395 = vpop.permute.xlu0 %394
    %v396 = vrot.slane %v92, 6
    %v397 = vrot.slane %v115, 6
    %v400 = vsel %vm138, %v395, 0
    %402 = vmatpush.msra.mxu0 0.0
    %403 = vmatpush.msra.mxu0 0.0
    %404 = vmatpush.msra.mxu0 0.0
    %405 = vmatpush.msra.mxu0 0.0
    %406 = vmatpush.msra.mxu0 0.0
    %407 = vmatpush.msra.mxu0 0.0
    %408 = vmatpush.msra.mxu0 0.0
    %409 = vmatpush.msra.mxu0 0.0
    %410 = vmatpush.msra.mxu0 %v134
    %411 = vmatpush.msra.mxu0 %v132
    %412 = vmatpush.msra.mxu0 %v130
    %413 = vmatpush.msra.mxu0 %v128
    %414 = vmatpush.msra.mxu0 %v126
    %415 = vmatpush.msra.mxu0 %v124
    %416 = vmatpush.msra.mxu0 %v122
    %417 = vmatpush.msra.mxu0 %v120
    %418 = vmatmul.f32.gmra.mxu0 %v400
    %v419 = vpop.f32.mrf.mxu0
    %v420 = vadd.f32 %v396, %v419
    %421 = vdwg.mxu0
    %422 = vmatpush.msra.mxu0 0.0
    %423 = vmatpush.msra.mxu0 0.0
    %424 = vmatpush.msra.mxu0 0.0
    %425 = vmatpush.msra.mxu0 0.0
    %426 = vmatpush.msra.mxu0 0.0
    %427 = vmatpush.msra.mxu0 0.0
    %428 = vmatpush.msra.mxu0 0.0
    %429 = vmatpush.msra.mxu0 0.0
    %430 = vmatpush.msra.mxu0 %v135
    %431 = vmatpush.msra.mxu0 %v133
    %432 = vmatpush.msra.mxu0 %v131
    %433 = vmatpush.msra.mxu0 %v129
    %434 = vmatpush.msra.mxu0 %v127
    %435 = vmatpush.msra.mxu0 %v125
    %436 = vmatpush.msra.mxu0 %v123
    %437 = vmatpush.msra.mxu0 %v121
    %438 = vmatmul.f32.gmra.mxu0 %v400
    %v439 = vpop.f32.mrf.mxu0
    %v440 = vadd.f32 %v397, %v439
    %441 = vdwg.mxu0
    %v442 = vxor.u32 %v420, 2147483648
    %v443 = vmul.f32 %v442, 1.442695
    %v444 = vpow.pop %v443
    %v445 = vadd.f32 %v444, 1.0
    %v446 = vrcp.pop %v445
    %v447 = vmul.f32 %v445, %v446
    %v448 = vsub.f32 1.0, %v447
    %v449 = vmul.f32 %v446, %v448
    %v450 = vadd.f32 %v446, %v449
    %vm451 = vweird.f32 %v445
    %vm452 = vweird.f32 %v446
    %vm453 = vmor %vm451, %vm452
    %v454 = vsel %vm453, %v446, %v450
    %v455 = vand.u32 2147483647, %v445
    %vm456 = vcmp.eq.f32.partialorder %v455, 8.507059e+37
    %v457 = vand.u32 %v445, 2147483648
    %v458 = vor.u32 1.1754944e-38, %v457
    %v459 = vsel %vm456, %v458, %v454
    %v460 = vmul.f32 1.0, %v459
    %462 = vrot.lane.b32.xlu0 %v440, 64
    %v463 = vpop.permute.xlu0 %462
    %v465 = vmul.f32 %v460, %v463
    %v466 = vadd.f32 %v440, %v465
    %v467 = vtanh.pop %v466
    %v468 = vsub.f32 1.0, %v460
    %470 = vrot.lane.b32.xlu0 %v467, 64
    %v471 = vpop.permute.xlu0 %470
    %v473 = vmul.f32 %v468, %v471
    %v474 = vmul.f32 %v460, %v392
    %v475 = vadd.f32 %v473, %v474
    %477 = vrot.lane.b32.xlu0 %v475, 64
    %v478 = vpop.permute.xlu0 %477
    %v479 = vsel %vm138, %v478, 0
    %481 = vmatpush.msra.mxu0 0.0
    %482 = vmatpush.msra.mxu0 0.0
    %483 = vmatpush.msra.mxu0 0.0
    %484 = vmatpush.msra.mxu0 0.0
    %485 = vmatpush.msra.mxu0 0.0
    %486 = vmatpush.msra.mxu0 0.0
    %487 = vmatpush.msra.mxu0 0.0
    %488 = vmatpush.msra.mxu0 0.0
    %489 = vmatpush.msra.mxu0 %v134
    %490 = vmatpush.msra.mxu0 %v132
    %491 = vmatpush.msra.mxu0 %v130
    %492 = vmatpush.msra.mxu0 %v128
    %493 = vmatpush.msra.mxu0 %v126
    %494 = vmatpush.msra.mxu0 %v124
    %495 = vmatpush.msra.mxu0 %v122
    %496 = vmatpush.msra.mxu0 %v120
    %497 = vmatmul.f32.gmra.mxu0 %v479
    %v498 = vpop.f32.mrf.mxu0
    %v499 = vadd.f32 %v95, %v498
    %500 = vdwg.mxu0
    %501 = vmatpush.msra.mxu0 0.0
    %502 = vmatpush.msra.mxu0 0.0
    %503 = vmatpush.msra.mxu0 0.0
    %504 = vmatpush.msra.mxu0 0.0
    %505 = vmatpush.msra.mxu0 0.0
    %506 = vmatpush.msra.mxu0 0.0
    %507 = vmatpush.msra.mxu0 0.0
    %508 = vmatpush.msra.mxu0 0.0
    %509 = vmatpush.msra.mxu0 %v135
    %510 = vmatpush.msra.mxu0 %v133
    %511 = vmatpush.msra.mxu0 %v131
    %512 = vmatpush.msra.mxu0 %v129
    %513 = vmatpush.msra.mxu0 %v127
    %514 = vmatpush.msra.mxu0 %v125
    %515 = vmatpush.msra.mxu0 %v123
    %516 = vmatpush.msra.mxu0 %v121
    %517 = vmatmul.f32.gmra.mxu0 %v479
    %v518 = vpop.f32.mrf.mxu0
    %v519 = vadd.f32 %v118, %v518
    %520 = vdwg.mxu0
    %v521 = vxor.u32 %v499, 2147483648
    %v522 = vmul.f32 %v521, 1.442695
    %v523 = vpow.pop %v522
    %v524 = vadd.f32 %v523, 1.0
    %v525 = vrcp.pop %v524
    %v526 = vmul.f32 %v524, %v525
    %v527 = vsub.f32 1.0, %v526
    %v528 = vmul.f32 %v525, %v527
    %v529 = vadd.f32 %v525, %v528
    %vm530 = vweird.f32 %v524
    %vm531 = vweird.f32 %v525
    %vm532 = vmor %vm530, %vm531
    %v533 = vsel %vm532, %v525, %v529
    %v534 = vand.u32 2147483647, %v524
    %vm535 = vcmp.eq.f32.partialorder %v534, 8.507059e+37
    %v536 = vand.u32 %v524, 2147483648
    %v537 = vor.u32 1.1754944e-38, %v536
    %v538 = vsel %vm535, %v537, %v533
    %v539 = vmul.f32 1.0, %v538
    %541 = vrot.lane.b32.xlu0 %v519, 64
    %v542 = vpop.permute.xlu0 %541
    %v544 = vmul.f32 %v539, %v542
    %v545 = vadd.f32 %v519, %v544
    %v546 = vtanh.pop %v545
    %v547 = vsub.f32 1.0, %v539
    %549 = vrot.lane.b32.xlu0 %v546, 64
    %v550 = vpop.permute.xlu0 %549
    %v552 = vmul.f32 %v547, %v550
    %v553 = vmul.f32 %v539, %v475
    %v554 = vadd.f32 %v552, %v553
    %556 = vrot.lane.b32.xlu0 %v554, 64
    %v557 = vpop.permute.xlu0 %556
    %v560 = vrot.slane %v95, 2
    %v561 = vrot.slane %v118, 2
    %v564 = vsel %vm138, %v557, 0
    %566 = vmatpush.msra.mxu0 0.0
    %567 = vmatpush.msra.mxu0 0.0
    %568 = vmatpush.msra.mxu0 0.0
    %569 = vmatpush.msra.mxu0 0.0
    %570 = vmatpush.msra.mxu0 0.0
    %571 = vmatpush.msra.mxu0 0.0
    %572 = vmatpush.msra.mxu0 0.0
    %573 = vmatpush.msra.mxu0 0.0
    %574 = vmatpush.msra.mxu0 %v134
    %575 = vmatpush.msra.mxu0 %v132
    %576 = vmatpush.msra.mxu0 %v130
    %577 = vmatpush.msra.mxu0 %v128
    %578 = vmatpush.msra.mxu0 %v126
    %579 = vmatpush.msra.mxu0 %v124
    %580 = vmatpush.msra.mxu0 %v122
    %581 = vmatpush.msra.mxu0 %v120
    %582 = vmatmul.f32.gmra.mxu0 %v564
    %v583 = vpop.f32.mrf.mxu0
    %v584 = vadd.f32 %v560, %v583
    %585 = vdwg.mxu0
    %586 = vmatpush.msra.mxu0 0.0
    %587 = vmatpush.msra.mxu0 0.0
    %588 = vmatpush.msra.mxu0 0.0
    %589 = vmatpush.msra.mxu0 0.0
    %590 = vmatpush.msra.mxu0 0.0
    %591 = vmatpush.msra.mxu0 0.0
    %592 = vmatpush.msra.mxu0 0.0
    %593 = vmatpush.msra.mxu0 0.0
    %594 = vmatpush.msra.mxu0 %v135
    %595 = vmatpush.msra.mxu0 %v133
    %596 = vmatpush.msra.mxu0 %v131
    %597 = vmatpush.msra.mxu0 %v129
    %598 = vmatpush.msra.mxu0 %v127
    %599 = vmatpush.msra.mxu0 %v125
    %600 = vmatpush.msra.mxu0 %v123
    %601 = vmatpush.msra.mxu0 %v121
    %602 = vmatmul.f32.gmra.mxu0 %v564
    %v603 = vpop.f32.mrf.mxu0
    %v604 = vadd.f32 %v561, %v603
    %605 = vdwg.mxu0
    %v606 = vxor.u32 %v584, 2147483648
    %v607 = vmul.f32 %v606, 1.442695
    %v608 = vpow.pop %v607
    %v609 = vadd.f32 %v608, 1.0
    %v610 = vrcp.pop %v609
    %v611 = vmul.f32 %v609, %v610
    %v612 = vsub.f32 1.0, %v611
    %v613 = vmul.f32 %v610, %v612
    %v614 = vadd.f32 %v610, %v613
    %vm615 = vweird.f32 %v609
    %vm616 = vweird.f32 %v610
    %vm617 = vmor %vm615, %vm616
    %v618 = vsel %vm617, %v610, %v614
    %v619 = vand.u32 2147483647, %v609
    %vm620 = vcmp.eq.f32.partialorder %v619, 8.507059e+37
    %v621 = vand.u32 %v609, 2147483648
    %v622 = vor.u32 1.1754944e-38, %v621
    %v623 = vsel %vm620, %v622, %v618
    %v624 = vmul.f32 1.0, %v623
    %626 = vrot.lane.b32.xlu0 %v604, 64
    %v627 = vpop.permute.xlu0 %626
    %v629 = vmul.f32 %v624, %v627
    %v630 = vadd.f32 %v604, %v629
    %v631 = vtanh.pop %v630
    %v632 = vsub.f32 1.0, %v624
    %634 = vrot.lane.b32.xlu0 %v631, 64
    %v635 = vpop.permute.xlu0 %634
    %v637 = vmul.f32 %v632, %v635
    %v638 = vmul.f32 %v624, %v554
    %v639 = vadd.f32 %v637, %v638
    %641 = vrot.lane.b32.xlu0 %v639, 64
    %v642 = vpop.permute.xlu0 %641
    %v643 = vrot.slane %v95, 4
    %v644 = vrot.slane %v118, 4
    %v647 = vsel %vm138, %v642, 0
    %649 = vmatpush.msra.mxu0 0.0
    %650 = vmatpush.msra.mxu0 0.0
    %651 = vmatpush.msra.mxu0 0.0
    %652 = vmatpush.msra.mxu0 0.0
    %653 = vmatpush.msra.mxu0 0.0
    %654 = vmatpush.msra.mxu0 0.0
    %655 = vmatpush.msra.mxu0 0.0
    %656 = vmatpush.msra.mxu0 0.0
    %657 = vmatpush.msra.mxu0 %v134
    %658 = vmatpush.msra.mxu0 %v132
    %659 = vmatpush.msra.mxu0 %v130
    %660 = vmatpush.msra.mxu0 %v128
    %661 = vmatpush.msra.mxu0 %v126
    %662 = vmatpush.msra.mxu0 %v124
    %663 = vmatpush.msra.mxu0 %v122
    %664 = vmatpush.msra.mxu0 %v120
    %665 = vmatmul.f32.gmra.mxu0 %v647
    %v666 = vpop.f32.mrf.mxu0
    %v667 = vadd.f32 %v643, %v666
    %668 = vdwg.mxu0
    %669 = vmatpush.msra.mxu0 0.0
    %670 = vmatpush.msra.mxu0 0.0
    %671 = vmatpush.msra.mxu0 0.0
    %672 = vmatpush.msra.mxu0 0.0
    %673 = vmatpush.msra.mxu0 0.0
    %674 = vmatpush.msra.mxu0 0.0
    %675 = vmatpush.msra.mxu0 0.0
    %676 = vmatpush.msra.mxu0 0.0
    %677 = vmatpush.msra.mxu0 %v135
    %678 = vmatpush.msra.mxu0 %v133
    %679 = vmatpush.msra.mxu0 %v131
    %680 = vmatpush.msra.mxu0 %v129
    %681 = vmatpush.msra.mxu0 %v127
    %682 = vmatpush.msra.mxu0 %v125
    %683 = vmatpush.msra.mxu0 %v123
    %684 = vmatpush.msra.mxu0 %v121
    %685 = vmatmul.f32.gmra.mxu0 %v647
    %v686 = vpop.f32.mrf.mxu0
    %v687 = vadd.f32 %v644, %v686
    %688 = vdwg.mxu0
    %v689 = vxor.u32 %v667, 2147483648
    %v690 = vmul.f32 %v689, 1.442695
    %v691 = vpow.pop %v690
    %v692 = vadd.f32 %v691, 1.0
    %v693 = vrcp.pop %v692
    %v694 = vmul.f32 %v692, %v693
    %v695 = vsub.f32 1.0, %v694
    %v696 = vmul.f32 %v693, %v695
    %v697 = vadd.f32 %v693, %v696
    %vm698 = vweird.f32 %v692
    %vm699 = vweird.f32 %v693
    %vm700 = vmor %vm698, %vm699
    %v701 = vsel %vm700, %v693, %v697
    %v702 = vand.u32 2147483647, %v692
    %vm703 = vcmp.eq.f32.partialorder %v702, 8.507059e+37
    %v704 = vand.u32 %v692, 2147483648
    %v705 = vor.u32 1.1754944e-38, %v704
    %v706 = vsel %vm703, %v705, %v701
    %v707 = vmul.f32 1.0, %v706
    %709 = vrot.lane.b32.xlu0 %v687, 64
    %v710 = vpop.permute.xlu0 %709
    %v712 = vmul.f32 %v707, %v710
    %v713 = vadd.f32 %v687, %v712
    %v714 = vtanh.pop %v713
    %v715 = vsub.f32 1.0, %v707
    %717 = vrot.lane.b32.xlu0 %v714, 64
    %v718 = vpop.permute.xlu0 %717
    %v720 = vmul.f32 %v715, %v718
    %v721 = vmul.f32 %v707, %v639
    %v722 = vadd.f32 %v720, %v721
    %724 = vrot.lane.b32.xlu0 %v722, 64
    %v725 = vpop.permute.xlu0 %724
    %v726 = vrot.slane %v95, 6
    %v727 = vrot.slane %v118, 6
    %v730 = vsel %vm138, %v725, 0
    %732 = vmatpush.msra.mxu0 0.0
    %733 = vmatpush.msra.mxu0 0.0
    %734 = vmatpush.msra.mxu0 0.0
    %735 = vmatpush.msra.mxu0 0.0
    %736 = vmatpush.msra.mxu0 0.0
    %737 = vmatpush.msra.mxu0 0.0
    %738 = vmatpush.msra.mxu0 0.0
    %739 = vmatpush.msra.mxu0 0.0
    %740 = vmatpush.msra.mxu0 %v134
    %741 = vmatpush.msra.mxu0 %v132
    %742 = vmatpush.msra.mxu0 %v130
    %743 = vmatpush.msra.mxu0 %v128
    %744 = vmatpush.msra.mxu0 %v126
    %745 = vmatpush.msra.mxu0 %v124
    %746 = vmatpush.msra.mxu0 %v122
    %747 = vmatpush.msra.mxu0 %v120
    %748 = vmatmul.f32.gmra.mxu0 %v730
    %v749 = vpop.f32.mrf.mxu0
    %v750 = vadd.f32 %v726, %v749
    %751 = vdwg.mxu0
    %752 = vmatpush.msra.mxu0 0.0
    %753 = vmatpush.msra.mxu0 0.0
    %754 = vmatpush.msra.mxu0 0.0
    %755 = vmatpush.msra.mxu0 0.0
    %756 = vmatpush.msra.mxu0 0.0
    %757 = vmatpush.msra.mxu0 0.0
    %758 = vmatpush.msra.mxu0 0.0
    %759 = vmatpush.msra.mxu0 0.0
    %760 = vmatpush.msra.mxu0 %v135
    %761 = vmatpush.msra.mxu0 %v133
    %762 = vmatpush.msra.mxu0 %v131
    %763 = vmatpush.msra.mxu0 %v129
    %764 = vmatpush.msra.mxu0 %v127
    %765 = vmatpush.msra.mxu0 %v125
    %766 = vmatpush.msra.mxu0 %v123
    %767 = vmatpush.msra.mxu0 %v121
    %768 = vmatmul.f32.gmra.mxu0 %v730
    %v769 = vpop.f32.mrf.mxu0
    %v770 = vadd.f32 %v727, %v769
    %771 = vdwg.mxu0
    %v772 = vxor.u32 %v750, 2147483648
    %v773 = vmul.f32 %v772, 1.442695
    %v774 = vpow.pop %v773
    %v775 = vadd.f32 %v774, 1.0
    %v776 = vrcp.pop %v775
    %v777 = vmul.f32 %v775, %v776
    %v778 = vsub.f32 1.0, %v777
    %v779 = vmul.f32 %v776, %v778
    %v780 = vadd.f32 %v776, %v779
    %vm781 = vweird.f32 %v775
    %vm782 = vweird.f32 %v776
    %vm783 = vmor %vm781, %vm782
    %v784 = vsel %vm783, %v776, %v780
    %v785 = vand.u32 2147483647, %v775
    %vm786 = vcmp.eq.f32.partialorder %v785, 8.507059e+37
    %v787 = vand.u32 %v775, 2147483648
    %v788 = vor.u32 1.1754944e-38, %v787
    %v789 = vsel %vm786, %v788, %v784
    %v790 = vmul.f32 1.0, %v789
    %792 = vrot.lane.b32.xlu0 %v770, 64
    %v793 = vpop.permute.xlu0 %792
    %v795 = vmul.f32 %v790, %v793
    %v796 = vadd.f32 %v770, %v795
    %v797 = vtanh.pop %v796
    %v798 = vsub.f32 1.0, %v790
    %800 = vrot.lane.b32.xlu0 %v797, 64
    %v801 = vpop.permute.xlu0 %800
    %v803 = vmul.f32 %v798, %v801
    %v804 = vmul.f32 %v790, %v722
    %v805 = vadd.f32 %v803, %v804
    %807 = vrot.lane.b32.xlu0 %v805, 64
    %v808 = vpop.permute.xlu0 %807
    %v809 = vsel %vm138, %v808, 0
    %811 = vmatpush.msra.mxu0 0.0
    %812 = vmatpush.msra.mxu0 0.0
    %813 = vmatpush.msra.mxu0 0.0
    %814 = vmatpush.msra.mxu0 0.0
    %815 = vmatpush.msra.mxu0 0.0
    %816 = vmatpush.msra.mxu0 0.0
    %817 = vmatpush.msra.mxu0 0.0
    %818 = vmatpush.msra.mxu0 0.0
    %819 = vmatpush.msra.mxu0 %v134
    %820 = vmatpush.msra.mxu0 %v132
    %821 = vmatpush.msra.mxu0 %v130
    %822 = vmatpush.msra.mxu0 %v128
    %823 = vmatpush.msra.mxu0 %v126
    %824 = vmatpush.msra.mxu0 %v124
    %825 = vmatpush.msra.mxu0 %v122
    %826 = vmatpush.msra.mxu0 %v120
    %827 = vmatmul.f32.gmra.mxu0 %v809
    %v828 = vpop.f32.mrf.mxu0
    %v829 = vadd.f32 %v726, %v828
    %830 = vdwg.mxu0
    %831 = vmatpush.msra.mxu0 0.0
    %832 = vmatpush.msra.mxu0 0.0
    %833 = vmatpush.msra.mxu0 0.0
    %834 = vmatpush.msra.mxu0 0.0
    %835 = vmatpush.msra.mxu0 0.0
    %836 = vmatpush.msra.mxu0 0.0
    %837 = vmatpush.msra.mxu0 0.0
    %838 = vmatpush.msra.mxu0 0.0
    %839 = vmatpush.msra.mxu0 %v135
    %840 = vmatpush.msra.mxu0 %v133
    %841 = vmatpush.msra.mxu0 %v131
    %842 = vmatpush.msra.mxu0 %v129
    %843 = vmatpush.msra.mxu0 %v127
    %844 = vmatpush.msra.mxu0 %v125
    %845 = vmatpush.msra.mxu0 %v123
    %846 = vmatpush.msra.mxu0 %v121
    %847 = vmatmul.f32.gmra.mxu0 %v809
    %v848 = vpop.f32.mrf.mxu0
    %v849 = vadd.f32 %v727, %v848
    %850 = vdwg.mxu0
    %v851 = vxor.u32 %v829, 2147483648
    %v852 = vmul.f32 %v851, 1.442695
    %v853 = vpow.pop %v852
    %v854 = vadd.f32 %v853, 1.0
    %v855 = vrcp.pop %v854
    %v856 = vmul.f32 %v854, %v855
    %v857 = vsub.f32 1.0, %v856
    %v858 = vmul.f32 %v855, %v857
    %v859 = vadd.f32 %v855, %v858
    %vm860 = vweird.f32 %v854
    %vm861 = vweird.f32 %v855
    %vm862 = vmor %vm860, %vm861
    %v863 = vsel %vm862, %v855, %v859
    %v864 = vand.u32 2147483647, %v854
    %vm865 = vcmp.eq.f32.partialorder %v864, 8.507059e+37
    %v866 = vand.u32 %v854, 2147483648
    %v867 = vor.u32 1.1754944e-38, %v866
    %v868 = vsel %vm865, %v867, %v863
    %v869 = vmul.f32 1.0, %v868
    %871 = vrot.lane.b32.xlu0 %v849, 64
    %v872 = vpop.permute.xlu0 %871
    %v874 = vmul.f32 %v869, %v872
    %v875 = vadd.f32 %v849, %v874
    %v876 = vtanh.pop %v875
    %v877 = vsub.f32 1.0, %v869
    %879 = vrot.lane.b32.xlu0 %v876, 64
    %v880 = vpop.permute.xlu0 %879
    %v882 = vmul.f32 %v877, %v880
    %v883 = vmul.f32 %v869, %v805
    %v884 = vadd.f32 %v882, %v883
    %vm885 = vcmp.ge.s32.totalorder %v137, 32
    %vm886 = vcmp.lt.s32.totalorder %v137, 64
    %vm887 = vmand %vm885, %vm886
    %889 = vrot.lane.b32.xlu0 %v884, 64
    %v890 = vpop.permute.xlu0 %889
    %v893 = vsel %vm887, %v890, %v808
    %894 = vrot.lane.b32.xlu0 %v309, 32
    %v895 = vpop.permute.xlu0 %894
    %898 = vrot.lane.b32.xlu0 %v475, 96
    %v899 = vpop.permute.xlu0 %898
    %901 = vrot.lane.b32.xlu0 %v639, 32
    %v902 = vpop.permute.xlu0 %901
    %905 = vrot.lane.b32.xlu0 %v805, 96
    %v906 = vpop.permute.xlu0 %905
    %909 = vrot.lane.b32.xlu0 %v893, 64
    %v910 = vpop.permute.xlu0 %909
    %vm912 = vcmask 261120
    %v913 = vsel %vm912, %v895, %v395
    %v914 = vsel %vm138, %v913, %v899
    %vm915 = vcmask 785408
    %v916 = vsel %vm915, %v914, %v554
    %v917 = vsel %vm912, %v902, %v725
    %v918 = vsel %vm138, %v917, %v906
    %v919 = vsel %vm915, %v918, %v910
    %v920 = vld [vmem:[%s3] sm:$0xff]
    %v921 = vld [vmem:[%s3 + $0x8] sm:$0xff]
    %v922 = vld [vmem:[%s3 + $0x10] sm:$0xff]
    %v923 = vld [vmem:[%s3 + $0x18] sm:$0xff]
    %v924 = vld [vmem:[%s3 + $0x20] sm:$0xff]
    %v925 = vld [vmem:[%s3 + $0x28] sm:$0xff]
    %v926 = vld [vmem:[%s3 + $0x30] sm:$0xff]
    %v927 = vld [vmem:[%s3 + $0x38] sm:$0xff]
    %v928 = vld [vmem:[%s3 + $0x40] sm:$0xff]
    %v929 = vld [vmem:[%s3 + $0x48] sm:$0xff]
    %v930 = vld [vmem:[%s3 + $0x50] sm:$0xff]
    %v931 = vld [vmem:[%s3 + $0x58] sm:$0xff]
    %v932 = vld [vmem:[%s3 + $0x60] sm:$0xff]
    %v933 = vld [vmem:[%s3 + $0x68] sm:$0xff]
    %v934 = vld [vmem:[%s3 + $0x70] sm:$0xff]
    %v935 = vld [vmem:[%s3 + $0x78] sm:$0xff]
    %v936 = vld [vmem:[%s3 + $0x80] sm:$0xff]
    %v937 = vld [vmem:[%s3 + $0x88] sm:$0xff]
    %v938 = vld [vmem:[%s3 + $0x90] sm:$0xff]
    %v939 = vld [vmem:[%s3 + $0x98] sm:$0xff]
    %v940 = vld [vmem:[%s3 + $0xa0] sm:$0xff]
    %v941 = vld [vmem:[%s3 + $0xa8] sm:$0xff]
    %v942 = vld [vmem:[%s3 + $0xb0] sm:$0xff]
    %v943 = vld [vmem:[%s3 + $0xb8] sm:$0xff]
    %v944 = vld [vmem:[%s3 + $0xc0] sm:$0xff]
    %v945 = vld [vmem:[%s3 + $0xc8] sm:$0xff]
    %v946 = vld [vmem:[%s3 + $0xd0] sm:$0xff]
    %v947 = vld [vmem:[%s3 + $0xd8] sm:$0xff]
    %v948 = vld [vmem:[%s3 + $0xe0] sm:$0xff]
    %v949 = vld [vmem:[%s3 + $0xe8] sm:$0xff]
    %v950 = vld [vmem:[%s3 + $0xf0] sm:$0xff]
    %v951 = vld [vmem:[%s3 + $0xf8] sm:$0xff]
    %v952 = vld [vmem:[%s3 + $0x100] sm:$0x1]
    %v953 = vperm.slane %v952, 0
    %954 = vmatpush.msra.mxu0 %v935
    %955 = vmatpush.msra.mxu0 %v934
    %956 = vmatpush.msra.mxu0 %v933
    %957 = vmatpush.msra.mxu0 %v932
    %958 = vmatpush.msra.mxu0 %v931
    %959 = vmatpush.msra.mxu0 %v930
    %960 = vmatpush.msra.mxu0 %v929
    %961 = vmatpush.msra.mxu0 %v928
    %962 = vmatpush.msra.mxu0 %v927
    %963 = vmatpush.msra.mxu0 %v926
    %964 = vmatpush.msra.mxu0 %v925
    %965 = vmatpush.msra.mxu0 %v924
    %966 = vmatpush.msra.mxu0 %v923
    %967 = vmatpush.msra.mxu0 %v922
    %968 = vmatpush.msra.mxu0 %v921
    %969 = vmatpush.msra.mxu0 %v920
    %970 = vmatmul.f32.gmra.mxu0 %v916
    %v971 = vpop.f32.mrf.mxu0
    %v972 = vadd.f32 %v953, %v971
    %973 = vdwg.mxu0
    %974 = vmatpush.msra.mxu0 %v951
    %975 = vmatpush.msra.mxu0 %v950
    %976 = vmatpush.msra.mxu0 %v949
    %977 = vmatpush.msra.mxu0 %v948
    %978 = vmatpush.msra.mxu0 %v947
    %979 = vmatpush.msra.mxu0 %v946
    %980 = vmatpush.msra.mxu0 %v945
    %981 = vmatpush.msra.mxu0 %v944
    %982 = vmatpush.msra.mxu0 %v943
    %983 = vmatpush.msra.mxu0 %v942
    %984 = vmatpush.msra.mxu0 %v941
    %985 = vmatpush.msra.mxu0 %v940
    %986 = vmatpush.msra.mxu0 %v939
    %987 = vmatpush.msra.mxu0 %v938
    %988 = vmatpush.msra.mxu0 %v937
    %989 = vmatpush.msra.mxu0 %v936
    %990 = vmatmul.f32.gmra.mxu0 %v919
    %v991 = vpop.f32.mrf.mxu0
    %v992 = vadd.f32 %v972, %v991
    %993 = vdwg.mxu0
    %vm994 = vcmask 74752
    %995 = vst.msk [vmem:[#allocation2] sm:$0x3] %vm994, %v992
    // Predicated region
    $region18: #{tpu_custom_call.1} parent=1 // pred_check
      _
    $region19: #{tpu_custom_call.1} parent=1 // pred_check_branch
      %997 = sbr.rel (0) target = $region21
    $region20: #{tpu_custom_call.1} parent=1 // pred_region
      %999 = vsyncadd [#allocation3], 0
      %s1001 = sshll.u32 [#allocation2], 4
      %s1002 = int_to_ptr.vmem [resolvable:$true] %s1001
      %s1003 = sshll.u32 %s4, 4
      %s1004 = int_to_ptr.hbm [resolvable:$true] %s1003
      %1006 = dma.vmem_to_hbm [thread:$0]  %s1002, 32, %s1004, [#allocation3]
    $region21: #{tpu_custom_call.1} parent=1 // pred_fallthru
      _
    // Predicated region
    $region22: #{tpu_custom_call.1} parent=1 // pred_check
      _
    $region23: #{tpu_custom_call.1} parent=1 // pred_check_branch
      %1008 = sbr.rel (0) target = $region25
    $region24: #{tpu_custom_call.1} parent=1 // pred_region
      %1010 = dma.done [#allocation3], 32
    $region25: #{tpu_custom_call.1} parent=1 // pred_fallthru
      _
    %1011 = vsyncpa [#allocation3], 1

</llo_original>
